<compile_context>
chip_gen: v7x
topology: tpu7x:2x2x1
jax: 0.10.0
libtpu: 0.0.40
codegen_flags: <defaults>
</compile_context>

<pallas_src>
import functools

import jax
import jax.numpy as jnp
from jax import lax
from jax.experimental import pallas as pl
from jax.experimental.pallas import tpu as pltpu


def _round_up(x, m):
    return ((x + m - 1) // m) * m


# ----------------------------------------------------------------------------
# Path A: word table resident in VMEM (small vocab) -- gather via vld slots.
# ----------------------------------------------------------------------------
def _embed_vmem_kernel(TN, TS, S_pad, N_real,
                       ids_smem, pos_ref, w_ref, out_ref):
    # ids_smem: (N_pad*S_pad,) int32 in SMEM (scalar prefetch)
    # pos_ref : (TS, D) position rows for this sequence tile (auto-pipelined VMEM)
    # w_ref   : (V, D) word table, VMEM-resident (constant-index BlockSpec)
    # out_ref : (TN, TS, D) output tile
    nb = pl.program_id(0)                       # batch-tile index (OUTER axis)
    sb = pl.program_id(1)                       # sequence-tile index (inner axis)
    row0 = pl.multiple_of(nb * TN, TN)          # first batch row of this tile
    col0 = pl.multiple_of(sb * TS, TS)          # first sequence position of tile

    for tn in range(TN):                        # static unroll over tile rows
        @pl.when(row0 + tn < N_real)            # skip padded batch rows
        def _row(tn=tn):
            base = (row0 + tn) * S_pad + col0   # hoisted: no div/mod per token

            def body(ts, carry):
                tok = ids_smem[base + ts]
                # Per-token gather is a VMEM vector load (vld slot) -- no DMA
                # descriptors.  The store is a lane-dense (1, 128) row.
                out_ref[tn, pl.ds(ts, 1), :] = (
                    w_ref[pl.ds(tok, 1), :] + pos_ref[pl.ds(ts, 1), :]
                ).astype(out_ref.dtype)
                return carry

            lax.fori_loop(0, TS, body, 0, unroll=min(TS, 8))


# ----------------------------------------------------------------------------
# Path B: word table stays in HBM (large vocab) -- batched manual DMA gather.
# ----------------------------------------------------------------------------
def _embed_hbm_kernel(TN, TS, S_pad, N_real,
                      ids_smem, pos_ref, w_hbm, out_ref, wbuf, sem):
    # ids_smem: (N_pad*S_pad,) int32 in SMEM (scalar prefetch)
    # pos_ref : (TS, D) position rows for this sequence tile
    # w_hbm   : (V, D) word table, raw HBM ref (memory_space=pl.ANY)
    # out_ref : (TN, TS, D) output tile
    # wbuf    : (TN, TS, D) VMEM scratch receiving the gathered word rows
    # sem     : scalar DMA semaphore shared by all gather copies of this tile
    nb = pl.program_id(0)
    sb = pl.program_id(1)
    row0 = pl.multiple_of(nb * TN, TN)
    col0 = pl.multiple_of(sb * TS, TS)

    # 1) Issue all word-row gather DMAs back-to-back so they overlap in flight.
    #    Static outer loop over rows (skipping padded ones), fori over columns,
    #    base offset hoisted -> a single scalar add of index math per token.
    for tn in range(TN):
        @pl.when(row0 + tn < N_real)
        def _issue(tn=tn):
            base = (row0 + tn) * S_pad + col0

            def body(ts, carry):
                tok = ids_smem[base + ts]
                pltpu.make_async_copy(
                    w_hbm.at[pl.ds(tok, 1)],        # (1, D) row of the HBM table
                    wbuf.at[tn, pl.ds(ts, 1)],      # (1, D) slot of the gather buf
                    sem,
                ).start()
                return carry

            lax.fori_loop(0, TS, body, 0, unroll=min(TS, 8))

    # 2) Drain with ONE wait per (valid) batch row: the DMA semaphore counts bytes,
    #    so a (TS, D)-shaped descriptor wait drains all TS row copies of that row.
    #    Guards match the issue guards exactly, so the byte count always balances.
    for tn in range(TN):
        @pl.when(row0 + tn < N_real)
        def _drain(tn=tn):
            pltpu.make_async_copy(
                w_hbm.at[pl.ds(0, TS)],             # (TS, D) -> same byte count
                wbuf.at[tn],                        # (TS, D)
                sem,
            ).wait()

    # 3) Dense (TN, TS, D) store; the position tile broadcasts over the batch axis.
    out_ref[...] = wbuf[...] + pos_ref[...]


# ----------------------------------------------------------------------------
# Wrapper.
# ----------------------------------------------------------------------------
def token_and_position_embedding(ids, word_emb, pos_emb, *,
                                 tokens_per_tile=1024,
                                 vmem_table_limit_bytes=4 * 1024 * 1024):
    """ids: (N, S) int token ids; word_emb: (V, D); pos_emb: (L, D) with S <= L."""
    N, S = ids.shape
    V, D = word_emb.shape
    L, Dp = pos_emb.shape
    assert D == Dp, "embedding dims must match"
    assert S <= L, "sequence length exceeds max_length"
    dtype = word_emb.dtype
    isz = jnp.dtype(dtype).itemsize

    # Sequence tile: multiple of 8 sublanes, capped at 128 rows.
    TS = min(128, _round_up(S, 8))
    S_pad = _round_up(S, TS)
    # Batch tile: enough rows to reach ~tokens_per_tile tokens per grid step.
    TN = max(1, min(N, tokens_per_tile // TS))
    N_pad = _round_up(N, TN)

    # Token ids, zero-padded and flattened to 1-D (compact SMEM layout).
    ids_p = jnp.zeros((N_pad, S_pad), jnp.int32).at[:N, :S].set(ids.astype(jnp.int32))
    ids_flat = ids_p.reshape(-1)

    # Position rows 0..S-1, zero-padded to S_pad rows (no gather needed: contiguous).
    pos_tab = pos_emb[:S].astype(dtype)
    if S_pad > S:
        pos_tab = jnp.pad(pos_tab, ((0, S_pad - S), (0, 0)))

    # Batch tiles OUTERMOST so the leading parallel axis has extent > 1 (v7x megacore).
    grid = (N_pad // TN, S_pad // TS)

    out_spec = pl.BlockSpec((TN, TS, D), lambda nb, sb, ids_ref: (nb, sb, 0))
    pos_spec = pl.BlockSpec((TS, D), lambda nb, sb, ids_ref: (sb, 0))

    table_bytes = V * D * isz
    use_vmem_table = table_bytes <= vmem_table_limit_bytes

    if use_vmem_table:
        # Small vocab: pin the whole table in VMEM (constant block index -> fetched
        # once) and gather with per-token vector loads.  ~2x table_bytes of VMEM
        # (double buffering) -- kept well under even v5e's 16 MiB scoped default.
        kernel = functools.partial(_embed_vmem_kernel, TN, TS, S_pad, N)
        word_spec = pl.BlockSpec((V, D), lambda nb, sb, ids_ref: (0, 0))
        scratch_shapes = []
        table_read_bytes = table_bytes
    else:
        # Large vocab (e.g. the spec's 100k x 128): table stays in HBM; rows are
        # gathered with batched manual DMAs and drained with one wait per row.
        assert V >= TS, "HBM-gather path assumes vocab_size >= sequence tile"
        kernel = functools.partial(_embed_hbm_kernel, TN, TS, S_pad, N)
        word_spec = pl.BlockSpec(memory_space=pl.ANY)
        scratch_shapes = [
            pltpu.VMEM((TN, TS, D), dtype),     # gathered word rows
            pltpu.SemaphoreType.DMA(()),        # shared gather semaphore
        ]
        table_read_bytes = N_pad * S_pad * D * isz

    grid_spec = pltpu.PrefetchScalarGridSpec(
        num_scalar_prefetch=1,                  # ids -> SMEM
        grid=grid,
        in_specs=[pos_spec, word_spec],
        out_specs=out_spec,
        scratch_shapes=scratch_shapes,
    )

    cost = pl.CostEstimate(
        flops=N_pad * S_pad * D,                # one add per output element
        transcendentals=0,
        bytes_accessed=(table_read_bytes        # word rows read
                        + S_pad * D * isz       # position tiles read
                        + N_pad * S_pad * 4     # token ids read
                        + N_pad * S_pad * D * isz),  # output written
    )

    out_pad = pl.pallas_call(
        kernel,
        grid_spec=grid_spec,
        out_shape=jax.ShapeDtypeStruct((N_pad, S_pad, D), dtype),
        compiler_params=pltpu.CompilerParams(
            dimension_semantics=("parallel", "parallel")),
        cost_estimate=cost,
    )(ids_flat, pos_tab, word_emb)

    return out_pad[:N, :S, :]


if __name__ == "__main__":
    # Module constants: embed_dim=128, max_length=128.
    N, S, D = 2, 8, 128
    L = 128

    key = jax.random.PRNGKey(0)
    k_w, k_p, k_ids, k_wbig, k_ids2 = jax.random.split(key, 5)

    pos_emb = jax.random.normal(k_p, (L, D), dtype=jnp.float32)
    pos_ref_rows = pos_emb[jnp.arange(S)][None, :, :]

    # --- Path A: small vocab (VMEM-resident table, vld-slot gather) -------------
    V_small = 1000
    word_emb = jax.random.normal(k_w, (V_small, D), dtype=jnp.float32)
    ids = jax.random.randint(k_ids, (N, S), minval=0, maxval=V_small, dtype=jnp.int32)

    out = jax.block_until_ready(token_and_position_embedding(ids, word_emb, pos_emb))
    ref = word_emb[ids] + pos_ref_rows
    assert out.shape == (N, S, D)
    assert jnp.allclose(out, ref, atol=1e-6, rtol=1e-6), "mismatch (VMEM path)"

    # Multi-tile coverage: force several batch tiles + padded rows (pl.when guards).
    N2 = 5
    ids2 = jax.random.randint(k_ids2, (N2, S), minval=0, maxval=V_small,
                              dtype=jnp.int32)
    out2 = jax.block_until_ready(
        token_and_position_embedding(ids2, word_emb, pos_emb, tokens_per_tile=32))
    ref2 = word_emb[ids2] + pos_ref_rows
    assert out2.shape == (N2, S, D)
    assert jnp.allclose(out2, ref2, atol=1e-6, rtol=1e-6), "mismatch (VMEM multi-tile)"

    # --- Path B: spec-sized vocab (vocab_size=100000 -> HBM table + DMA gather) --
    V_big = 100000
    word_emb_big = jax.random.normal(k_wbig, (V_big, D), dtype=jnp.float32)
    ids_big = jax.random.randint(k_ids2, (N2, S), minval=0, maxval=V_big,
                                 dtype=jnp.int32)
    out_big = jax.block_until_ready(
        token_and_position_embedding(ids_big, word_emb_big, pos_emb,
                                     tokens_per_tile=32))
    ref_big = word_emb_big[ids_big] + pos_ref_rows
    assert out_big.shape == (N2, S, D)
    assert jnp.allclose(out_big, ref_big, atol=1e-6, rtol=1e-6), "mismatch (HBM path)"

    print("KERNEL_OK")
</pallas_src>

<mosaic_0001>
module attributes {stable_mosaic.version = 11 : i64} {
  func.func @_embed_vmem_kernel(%arg0: i32, %arg1: i32, %arg2: memref<16xi32, #tpu.memory_space<smem>>, %arg3: memref<8x128xf32, #tpu.memory_space<vmem>>, %arg4: memref<1000x128xf32, #tpu.memory_space<vmem>>, %arg5: memref<2x8x128xf32, #tpu.memory_space<vmem>>) attributes {dimension_semantics = [#tpu.dimension_semantics<parallel>, #tpu.dimension_semantics<parallel>], iteration_bounds = array<i64: 1, 1>, scalar_prefetch = 1 : i64, scratch_operands = 0 : i64, tpu.core_type = #tpu.core_type<tc>, window_params = [{transform_indices = @transform_0, window_bounds = array<i64: 8, 128>}, {pipeline_mode = #tpu.pipeline_mode<synchronous>, transform_indices = @transform_1, window_bounds = array<i64: 1000, 128>}, {transform_indices = @transform_2, window_bounds = array<i64: 2, 8, 128>}]} {
    %c2_i32 = arith.constant 2 : i32
    %0 = arith.muli %arg0, %c2_i32 : i32
    %1 = tpu.assume_multiple %0, 2 : i32
    %c8_i32 = arith.constant 8 : i32
    %2 = arith.muli %arg1, %c8_i32 : i32
    %3 = tpu.assume_multiple %2, 8 : i32
    %c0_i32 = arith.constant 0 : i32
    %4 = arith.addi %1, %c0_i32 : i32
    %c2_i32_0 = arith.constant 2 : i32
    %5 = arith.cmpi slt, %4, %c2_i32_0 : i32
    %6 = arith.extui %5 : i1 to i32
    %c0_i32_1 = arith.constant 0 : i32
    %7 = arith.cmpi ne, %6, %c0_i32_1 : i32
    scf.if %7 {
      %c0_i32_4 = arith.constant 0 : i32
      %12 = arith.addi %1, %c0_i32_4 : i32
      %c8_i32_5 = arith.constant 8 : i32
      %13 = arith.muli %12, %c8_i32_5 : i32
      %14 = arith.addi %13, %3 : i32
      %c0_i32_6 = arith.constant 0 : i32
      %15 = arith.addi %14, %c0_i32_6 : i32
      %16 = arith.index_cast %15 : i32 to index
      %17 = memref.load %arg2[%16] : memref<16xi32, #tpu.memory_space<smem>>
      %18 = arith.index_cast %17 : i32 to index
      %c0 = arith.constant 0 : index
      %19 = vector.load %arg4[%18, %c0] : memref<1000x128xf32, #tpu.memory_space<vmem>>, vector<1x128xf32>
      %20 = arith.index_cast %c0_i32_6 : i32 to index
      %c0_7 = arith.constant 0 : index
      %21 = vector.load %arg3[%20, %c0_7] : memref<8x128xf32, #tpu.memory_space<vmem>>, vector<1x128xf32>
      %22 = arith.addf %19, %21 : vector<1x128xf32>
      %c0_8 = arith.constant 0 : index
      %23 = arith.index_cast %c0_i32_6 : i32 to index
      %c0_9 = arith.constant 0 : index
      %24 = vector.load %arg5[%c0_8, %23, %c0_9] : memref<2x8x128xf32, #tpu.memory_space<vmem>>, vector<1x1x128xf32>
      %25 = vector.shape_cast %24 : vector<1x1x128xf32> to vector<1x128xf32>
      %26 = vector.shape_cast %22 : vector<1x128xf32> to vector<1x1x128xf32>
      tpu.vector_store %arg5[%c0_8, %23, %c0_9], %26 {strides = array<i32>} : memref<2x8x128xf32, #tpu.memory_space<vmem>>, vector<1x1x128xf32>,
      %c1_i32_10 = arith.constant 1 : i32
      %27 = arith.addi %14, %c1_i32_10 : i32
      %28 = arith.index_cast %27 : i32 to index
      %29 = memref.load %arg2[%28] : memref<16xi32, #tpu.memory_space<smem>>
      %30 = arith.index_cast %29 : i32 to index
      %c0_11 = arith.constant 0 : index
      %31 = vector.load %arg4[%30, %c0_11] : memref<1000x128xf32, #tpu.memory_space<vmem>>, vector<1x128xf32>
      %32 = arith.index_cast %c1_i32_10 : i32 to index
      %c0_12 = arith.constant 0 : index
      %33 = vector.load %arg3[%32, %c0_12] : memref<8x128xf32, #tpu.memory_space<vmem>>, vector<1x128xf32>
      %34 = arith.addf %31, %33 : vector<1x128xf32>
      %c0_13 = arith.constant 0 : index
      %35 = arith.index_cast %c1_i32_10 : i32 to index
      %c0_14 = arith.constant 0 : index
      %36 = vector.load %arg5[%c0_13, %35, %c0_14] : memref<2x8x128xf32, #tpu.memory_space<vmem>>, vector<1x1x128xf32>
      %37 = vector.shape_cast %36 : vector<1x1x128xf32> to vector<1x128xf32>
      %38 = vector.shape_cast %34 : vector<1x128xf32> to vector<1x1x128xf32>
      tpu.vector_store %arg5[%c0_13, %35, %c0_14], %38 {strides = array<i32>} : memref<2x8x128xf32, #tpu.memory_space<vmem>>, vector<1x1x128xf32>,
      %c2_i32_15 = arith.constant 2 : i32
      %39 = arith.addi %14, %c2_i32_15 : i32
      %40 = arith.index_cast %39 : i32 to index
      %41 = memref.load %arg2[%40] : memref<16xi32, #tpu.memory_space<smem>>
      %42 = arith.index_cast %41 : i32 to index
      %c0_16 = arith.constant 0 : index
      %43 = vector.load %arg4[%42, %c0_16] : memref<1000x128xf32, #tpu.memory_space<vmem>>, vector<1x128xf32>
      %44 = arith.index_cast %c2_i32_15 : i32 to index
      %c0_17 = arith.constant 0 : index
      %45 = vector.load %arg3[%44, %c0_17] : memref<8x128xf32, #tpu.memory_space<vmem>>, vector<1x128xf32>
      %46 = arith.addf %43, %45 : vector<1x128xf32>
      %c0_18 = arith.constant 0 : index
      %47 = arith.index_cast %c2_i32_15 : i32 to index
      %c0_19 = arith.constant 0 : index
      %48 = vector.load %arg5[%c0_18, %47, %c0_19] : memref<2x8x128xf32, #tpu.memory_space<vmem>>, vector<1x1x128xf32>
      %49 = vector.shape_cast %48 : vector<1x1x128xf32> to vector<1x128xf32>
      %50 = vector.shape_cast %46 : vector<1x128xf32> to vector<1x1x128xf32>
      tpu.vector_store %arg5[%c0_18, %47, %c0_19], %50 {strides = array<i32>} : memref<2x8x128xf32, #tpu.memory_space<vmem>>, vector<1x1x128xf32>,
      %c3_i32 = arith.constant 3 : i32
      %51 = arith.addi %14, %c3_i32 : i32
      %52 = arith.index_cast %51 : i32 to index
      %53 = memref.load %arg2[%52] : memref<16xi32, #tpu.memory_space<smem>>
      %54 = arith.index_cast %53 : i32 to index
      %c0_20 = arith.constant 0 : index
      %55 = vector.load %arg4[%54, %c0_20] : memref<1000x128xf32, #tpu.memory_space<vmem>>, vector<1x128xf32>
      %56 = arith.index_cast %c3_i32 : i32 to index
      %c0_21 = arith.constant 0 : index
      %57 = vector.load %arg3[%56, %c0_21] : memref<8x128xf32, #tpu.memory_space<vmem>>, vector<1x128xf32>
      %58 = arith.addf %55, %57 : vector<1x128xf32>
      %c0_22 = arith.constant 0 : index
      %59 = arith.index_cast %c3_i32 : i32 to index
      %c0_23 = arith.constant 0 : index
      %60 = vector.load %arg5[%c0_22, %59, %c0_23] : memref<2x8x128xf32, #tpu.memory_space<vmem>>, vector<1x1x128xf32>
      %61 = vector.shape_cast %60 : vector<1x1x128xf32> to vector<1x128xf32>
      %62 = vector.shape_cast %58 : vector<1x128xf32> to vector<1x1x128xf32>
      tpu.vector_store %arg5[%c0_22, %59, %c0_23], %62 {strides = array<i32>} : memref<2x8x128xf32, #tpu.memory_space<vmem>>, vector<1x1x128xf32>,
      %c4_i32 = arith.constant 4 : i32
      %63 = arith.addi %14, %c4_i32 : i32
      %64 = arith.index_cast %63 : i32 to index
      %65 = memref.load %arg2[%64] : memref<16xi32, #tpu.memory_space<smem>>
      %66 = arith.index_cast %65 : i32 to index
      %c0_24 = arith.constant 0 : index
      %67 = vector.load %arg4[%66, %c0_24] : memref<1000x128xf32, #tpu.memory_space<vmem>>, vector<1x128xf32>
      %68 = arith.index_cast %c4_i32 : i32 to index
      %c0_25 = arith.constant 0 : index
      %69 = vector.load %arg3[%68, %c0_25] : memref<8x128xf32, #tpu.memory_space<vmem>>, vector<1x128xf32>
      %70 = arith.addf %67, %69 : vector<1x128xf32>
      %c0_26 = arith.constant 0 : index
      %71 = arith.index_cast %c4_i32 : i32 to index
      %c0_27 = arith.constant 0 : index
      %72 = vector.load %arg5[%c0_26, %71, %c0_27] : memref<2x8x128xf32, #tpu.memory_space<vmem>>, vector<1x1x128xf32>
      %73 = vector.shape_cast %72 : vector<1x1x128xf32> to vector<1x128xf32>
      %74 = vector.shape_cast %70 : vector<1x128xf32> to vector<1x1x128xf32>
      tpu.vector_store %arg5[%c0_26, %71, %c0_27], %74 {strides = array<i32>} : memref<2x8x128xf32, #tpu.memory_space<vmem>>, vector<1x1x128xf32>,
      %c5_i32 = arith.constant 5 : i32
      %75 = arith.addi %14, %c5_i32 : i32
      %76 = arith.index_cast %75 : i32 to index
      %77 = memref.load %arg2[%76] : memref<16xi32, #tpu.memory_space<smem>>
      %78 = arith.index_cast %77 : i32 to index
      %c0_28 = arith.constant 0 : index
      %79 = vector.load %arg4[%78, %c0_28] : memref<1000x128xf32, #tpu.memory_space<vmem>>, vector<1x128xf32>
      %80 = arith.index_cast %c5_i32 : i32 to index
      %c0_29 = arith.constant 0 : index
      %81 = vector.load %arg3[%80, %c0_29] : memref<8x128xf32, #tpu.memory_space<vmem>>, vector<1x128xf32>
      %82 = arith.addf %79, %81 : vector<1x128xf32>
      %c0_30 = arith.constant 0 : index
      %83 = arith.index_cast %c5_i32 : i32 to index
      %c0_31 = arith.constant 0 : index
      %84 = vector.load %arg5[%c0_30, %83, %c0_31] : memref<2x8x128xf32, #tpu.memory_space<vmem>>, vector<1x1x128xf32>
      %85 = vector.shape_cast %84 : vector<1x1x128xf32> to vector<1x128xf32>
      %86 = vector.shape_cast %82 : vector<1x128xf32> to vector<1x1x128xf32>
      tpu.vector_store %arg5[%c0_30, %83, %c0_31], %86 {strides = array<i32>} : memref<2x8x128xf32, #tpu.memory_space<vmem>>, vector<1x1x128xf32>,
      %c6_i32 = arith.constant 6 : i32
      %87 = arith.addi %14, %c6_i32 : i32
      %88 = arith.index_cast %87 : i32 to index
      %89 = memref.load %arg2[%88] : memref<16xi32, #tpu.memory_space<smem>>
      %90 = arith.index_cast %89 : i32 to index
      %c0_32 = arith.constant 0 : index
      %91 = vector.load %arg4[%90, %c0_32] : memref<1000x128xf32, #tpu.memory_space<vmem>>, vector<1x128xf32>
      %92 = arith.index_cast %c6_i32 : i32 to index
      %c0_33 = arith.constant 0 : index
      %93 = vector.load %arg3[%92, %c0_33] : memref<8x128xf32, #tpu.memory_space<vmem>>, vector<1x128xf32>
      %94 = arith.addf %91, %93 : vector<1x128xf32>
      %c0_34 = arith.constant 0 : index
      %95 = arith.index_cast %c6_i32 : i32 to index
      %c0_35 = arith.constant 0 : index
      %96 = vector.load %arg5[%c0_34, %95, %c0_35] : memref<2x8x128xf32, #tpu.memory_space<vmem>>, vector<1x1x128xf32>
      %97 = vector.shape_cast %96 : vector<1x1x128xf32> to vector<1x128xf32>
      %98 = vector.shape_cast %94 : vector<1x128xf32> to vector<1x1x128xf32>
      tpu.vector_store %arg5[%c0_34, %95, %c0_35], %98 {strides = array<i32>} : memref<2x8x128xf32, #tpu.memory_space<vmem>>, vector<1x1x128xf32>,
      %c7_i32 = arith.constant 7 : i32
      %99 = arith.addi %14, %c7_i32 : i32
      %100 = arith.index_cast %99 : i32 to index
      %101 = memref.load %arg2[%100] : memref<16xi32, #tpu.memory_space<smem>>
      %102 = arith.index_cast %101 : i32 to index
      %c0_36 = arith.constant 0 : index
      %103 = vector.load %arg4[%102, %c0_36] : memref<1000x128xf32, #tpu.memory_space<vmem>>, vector<1x128xf32>
      %104 = arith.index_cast %c7_i32 : i32 to index
      %c0_37 = arith.constant 0 : index
      %105 = vector.load %arg3[%104, %c0_37] : memref<8x128xf32, #tpu.memory_space<vmem>>, vector<1x128xf32>
      %106 = arith.addf %103, %105 : vector<1x128xf32>
      %c0_38 = arith.constant 0 : index
      %107 = arith.index_cast %c7_i32 : i32 to index
      %c0_39 = arith.constant 0 : index
      %108 = vector.load %arg5[%c0_38, %107, %c0_39] : memref<2x8x128xf32, #tpu.memory_space<vmem>>, vector<1x1x128xf32>
      %109 = vector.shape_cast %108 : vector<1x1x128xf32> to vector<1x128xf32>
      %110 = vector.shape_cast %106 : vector<1x128xf32> to vector<1x1x128xf32>
      tpu.vector_store %arg5[%c0_38, %107, %c0_39], %110 {strides = array<i32>} : memref<2x8x128xf32, #tpu.memory_space<vmem>>, vector<1x1x128xf32>,
      %c8_i32_40 = arith.constant 8 : i32
    } else {
    }
    %c1_i32 = arith.constant 1 : i32
    %8 = arith.addi %1, %c1_i32 : i32
    %c2_i32_2 = arith.constant 2 : i32
    %9 = arith.cmpi slt, %8, %c2_i32_2 : i32
    %10 = arith.extui %9 : i1 to i32
    %c0_i32_3 = arith.constant 0 : i32
    %11 = arith.cmpi ne, %10, %c0_i32_3 : i32
    scf.if %11 {
      %c1_i32_4 = arith.constant 1 : i32
      %12 = arith.addi %1, %c1_i32_4 : i32
      %c8_i32_5 = arith.constant 8 : i32
      %13 = arith.muli %12, %c8_i32_5 : i32
      %14 = arith.addi %13, %3 : i32
      %c0_i32_6 = arith.constant 0 : i32
      %15 = arith.addi %14, %c0_i32_6 : i32
      %16 = arith.index_cast %15 : i32 to index
      %17 = memref.load %arg2[%16] : memref<16xi32, #tpu.memory_space<smem>>
      %18 = arith.index_cast %17 : i32 to index
      %c0 = arith.constant 0 : index
      %19 = vector.load %arg4[%18, %c0] : memref<1000x128xf32, #tpu.memory_space<vmem>>, vector<1x128xf32>
      %20 = arith.index_cast %c0_i32_6 : i32 to index
      %c0_7 = arith.constant 0 : index
      %21 = vector.load %arg3[%20, %c0_7] : memref<8x128xf32, #tpu.memory_space<vmem>>, vector<1x128xf32>
      %22 = arith.addf %19, %21 : vector<1x128xf32>
      %c1 = arith.constant 1 : index
      %23 = arith.index_cast %c0_i32_6 : i32 to index
      %c0_8 = arith.constant 0 : index
      %24 = vector.load %arg5[%c1, %23, %c0_8] : memref<2x8x128xf32, #tpu.memory_space<vmem>>, vector<1x1x128xf32>
      %25 = vector.shape_cast %24 : vector<1x1x128xf32> to vector<1x128xf32>
      %26 = vector.shape_cast %22 : vector<1x128xf32> to vector<1x1x128xf32>
      tpu.vector_store %arg5[%c1, %23, %c0_8], %26 {strides = array<i32>} : memref<2x8x128xf32, #tpu.memory_space<vmem>>, vector<1x1x128xf32>,
      %c1_i32_9 = arith.constant 1 : i32
      %27 = arith.addi %14, %c1_i32_9 : i32
      %28 = arith.index_cast %27 : i32 to index
      %29 = memref.load %arg2[%28] : memref<16xi32, #tpu.memory_space<smem>>
      %30 = arith.index_cast %29 : i32 to index
      %c0_10 = arith.constant 0 : index
      %31 = vector.load %arg4[%30, %c0_10] : memref<1000x128xf32, #tpu.memory_space<vmem>>, vector<1x128xf32>
      %32 = arith.index_cast %c1_i32_9 : i32 to index
      %c0_11 = arith.constant 0 : index
      %33 = vector.load %arg3[%32, %c0_11] : memref<8x128xf32, #tpu.memory_space<vmem>>, vector<1x128xf32>
      %34 = arith.addf %31, %33 : vector<1x128xf32>
      %c1_12 = arith.constant 1 : index
      %35 = arith.index_cast %c1_i32_9 : i32 to index
      %c0_13 = arith.constant 0 : index
      %36 = vector.load %arg5[%c1_12, %35, %c0_13] : memref<2x8x128xf32, #tpu.memory_space<vmem>>, vector<1x1x128xf32>
      %37 = vector.shape_cast %36 : vector<1x1x128xf32> to vector<1x128xf32>
      %38 = vector.shape_cast %34 : vector<1x128xf32> to vector<1x1x128xf32>
      tpu.vector_store %arg5[%c1_12, %35, %c0_13], %38 {strides = array<i32>} : memref<2x8x128xf32, #tpu.memory_space<vmem>>, vector<1x1x128xf32>,
      %c2_i32_14 = arith.constant 2 : i32
      %39 = arith.addi %14, %c2_i32_14 : i32
      %40 = arith.index_cast %39 : i32 to index
      %41 = memref.load %arg2[%40] : memref<16xi32, #tpu.memory_space<smem>>
      %42 = arith.index_cast %41 : i32 to index
      %c0_15 = arith.constant 0 : index
      %43 = vector.load %arg4[%42, %c0_15] : memref<1000x128xf32, #tpu.memory_space<vmem>>, vector<1x128xf32>
      %44 = arith.index_cast %c2_i32_14 : i32 to index
      %c0_16 = arith.constant 0 : index
      %45 = vector.load %arg3[%44, %c0_16] : memref<8x128xf32, #tpu.memory_space<vmem>>, vector<1x128xf32>
      %46 = arith.addf %43, %45 : vector<1x128xf32>
      %c1_17 = arith.constant 1 : index
      %47 = arith.index_cast %c2_i32_14 : i32 to index
      %c0_18 = arith.constant 0 : index
      %48 = vector.load %arg5[%c1_17, %47, %c0_18] : memref<2x8x128xf32, #tpu.memory_space<vmem>>, vector<1x1x128xf32>
      %49 = vector.shape_cast %48 : vector<1x1x128xf32> to vector<1x128xf32>
      %50 = vector.shape_cast %46 : vector<1x128xf32> to vector<1x1x128xf32>
      tpu.vector_store %arg5[%c1_17, %47, %c0_18], %50 {strides = array<i32>} : memref<2x8x128xf32, #tpu.memory_space<vmem>>, vector<1x1x128xf32>,
      %c3_i32 = arith.constant 3 : i32
      %51 = arith.addi %14, %c3_i32 : i32
      %52 = arith.index_cast %51 : i32 to index
      %53 = memref.load %arg2[%52] : memref<16xi32, #tpu.memory_space<smem>>
      %54 = arith.index_cast %53 : i32 to index
      %c0_19 = arith.constant 0 : index
      %55 = vector.load %arg4[%54, %c0_19] : memref<1000x128xf32, #tpu.memory_space<vmem>>, vector<1x128xf32>
      %56 = arith.index_cast %c3_i32 : i32 to index
      %c0_20 = arith.constant 0 : index
      %57 = vector.load %arg3[%56, %c0_20] : memref<8x128xf32, #tpu.memory_space<vmem>>, vector<1x128xf32>
      %58 = arith.addf %55, %57 : vector<1x128xf32>
      %c1_21 = arith.constant 1 : index
      %59 = arith.index_cast %c3_i32 : i32 to index
      %c0_22 = arith.constant 0 : index
      %60 = vector.load %arg5[%c1_21, %59, %c0_22] : memref<2x8x128xf32, #tpu.memory_space<vmem>>, vector<1x1x128xf32>
      %61 = vector.shape_cast %60 : vector<1x1x128xf32> to vector<1x128xf32>
      %62 = vector.shape_cast %58 : vector<1x128xf32> to vector<1x1x128xf32>
      tpu.vector_store %arg5[%c1_21, %59, %c0_22], %62 {strides = array<i32>} : memref<2x8x128xf32, #tpu.memory_space<vmem>>, vector<1x1x128xf32>,
      %c4_i32 = arith.constant 4 : i32
      %63 = arith.addi %14, %c4_i32 : i32
      %64 = arith.index_cast %63 : i32 to index
      %65 = memref.load %arg2[%64] : memref<16xi32, #tpu.memory_space<smem>>
      %66 = arith.index_cast %65 : i32 to index
      %c0_23 = arith.constant 0 : index
      %67 = vector.load %arg4[%66, %c0_23] : memref<1000x128xf32, #tpu.memory_space<vmem>>, vector<1x128xf32>
      %68 = arith.index_cast %c4_i32 : i32 to index
      %c0_24 = arith.constant 0 : index
      %69 = vector.load %arg3[%68, %c0_24] : memref<8x128xf32, #tpu.memory_space<vmem>>, vector<1x128xf32>
      %70 = arith.addf %67, %69 : vector<1x128xf32>
      %c1_25 = arith.constant 1 : index
      %71 = arith.index_cast %c4_i32 : i32 to index
      %c0_26 = arith.constant 0 : index
      %72 = vector.load %arg5[%c1_25, %71, %c0_26] : memref<2x8x128xf32, #tpu.memory_space<vmem>>, vector<1x1x128xf32>
      %73 = vector.shape_cast %72 : vector<1x1x128xf32> to vector<1x128xf32>
      %74 = vector.shape_cast %70 : vector<1x128xf32> to vector<1x1x128xf32>
      tpu.vector_store %arg5[%c1_25, %71, %c0_26], %74 {strides = array<i32>} : memref<2x8x128xf32, #tpu.memory_space<vmem>>, vector<1x1x128xf32>,
      %c5_i32 = arith.constant 5 : i32
      %75 = arith.addi %14, %c5_i32 : i32
      %76 = arith.index_cast %75 : i32 to index
      %77 = memref.load %arg2[%76] : memref<16xi32, #tpu.memory_space<smem>>
      %78 = arith.index_cast %77 : i32 to index
      %c0_27 = arith.constant 0 : index
      %79 = vector.load %arg4[%78, %c0_27] : memref<1000x128xf32, #tpu.memory_space<vmem>>, vector<1x128xf32>
      %80 = arith.index_cast %c5_i32 : i32 to index
      %c0_28 = arith.constant 0 : index
      %81 = vector.load %arg3[%80, %c0_28] : memref<8x128xf32, #tpu.memory_space<vmem>>, vector<1x128xf32>
      %82 = arith.addf %79, %81 : vector<1x128xf32>
      %c1_29 = arith.constant 1 : index
      %83 = arith.index_cast %c5_i32 : i32 to index
      %c0_30 = arith.constant 0 : index
      %84 = vector.load %arg5[%c1_29, %83, %c0_30] : memref<2x8x128xf32, #tpu.memory_space<vmem>>, vector<1x1x128xf32>
      %85 = vector.shape_cast %84 : vector<1x1x128xf32> to vector<1x128xf32>
      %86 = vector.shape_cast %82 : vector<1x128xf32> to vector<1x1x128xf32>
      tpu.vector_store %arg5[%c1_29, %83, %c0_30], %86 {strides = array<i32>} : memref<2x8x128xf32, #tpu.memory_space<vmem>>, vector<1x1x128xf32>,
      %c6_i32 = arith.constant 6 : i32
      %87 = arith.addi %14, %c6_i32 : i32
      %88 = arith.index_cast %87 : i32 to index
      %89 = memref.load %arg2[%88] : memref<16xi32, #tpu.memory_space<smem>>
      %90 = arith.index_cast %89 : i32 to index
      %c0_31 = arith.constant 0 : index
      %91 = vector.load %arg4[%90, %c0_31] : memref<1000x128xf32, #tpu.memory_space<vmem>>, vector<1x128xf32>
      %92 = arith.index_cast %c6_i32 : i32 to index
      %c0_32 = arith.constant 0 : index
      %93 = vector.load %arg3[%92, %c0_32] : memref<8x128xf32, #tpu.memory_space<vmem>>, vector<1x128xf32>
      %94 = arith.addf %91, %93 : vector<1x128xf32>
      %c1_33 = arith.constant 1 : index
      %95 = arith.index_cast %c6_i32 : i32 to index
      %c0_34 = arith.constant 0 : index
      %96 = vector.load %arg5[%c1_33, %95, %c0_34] : memref<2x8x128xf32, #tpu.memory_space<vmem>>, vector<1x1x128xf32>
      %97 = vector.shape_cast %96 : vector<1x1x128xf32> to vector<1x128xf32>
      %98 = vector.shape_cast %94 : vector<1x128xf32> to vector<1x1x128xf32>
      tpu.vector_store %arg5[%c1_33, %95, %c0_34], %98 {strides = array<i32>} : memref<2x8x128xf32, #tpu.memory_space<vmem>>, vector<1x1x128xf32>,
      %c7_i32 = arith.constant 7 : i32
      %99 = arith.addi %14, %c7_i32 : i32
      %100 = arith.index_cast %99 : i32 to index
      %101 = memref.load %arg2[%100] : memref<16xi32, #tpu.memory_space<smem>>
      %102 = arith.index_cast %101 : i32 to index
      %c0_35 = arith.constant 0 : index
      %103 = vector.load %arg4[%102, %c0_35] : memref<1000x128xf32, #tpu.memory_space<vmem>>, vector<1x128xf32>
      %104 = arith.index_cast %c7_i32 : i32 to index
      %c0_36 = arith.constant 0 : index
      %105 = vector.load %arg3[%104, %c0_36] : memref<8x128xf32, #tpu.memory_space<vmem>>, vector<1x128xf32>
      %106 = arith.addf %103, %105 : vector<1x128xf32>
      %c1_37 = arith.constant 1 : index
      %107 = arith.index_cast %c7_i32 : i32 to index
      %c0_38 = arith.constant 0 : index
      %108 = vector.load %arg5[%c1_37, %107, %c0_38] : memref<2x8x128xf32, #tpu.memory_space<vmem>>, vector<1x1x128xf32>
      %109 = vector.shape_cast %108 : vector<1x1x128xf32> to vector<1x128xf32>
      %110 = vector.shape_cast %106 : vector<1x128xf32> to vector<1x1x128xf32>
      tpu.vector_store %arg5[%c1_37, %107, %c0_38], %110 {strides = array<i32>} : memref<2x8x128xf32, #tpu.memory_space<vmem>>, vector<1x1x128xf32>,
      %c8_i32_39 = arith.constant 8 : i32
    } else {
    }
    return
  }
  func.func @transform_0(%arg0: i32, %arg1: i32, %arg2: memref<16xi32, #tpu.memory_space<smem>>) -> (i32, i32) {
    %c0_i32 = arith.constant 0 : i32
    %c0_i32_0 = arith.constant 0 : i32
    return %arg1, %c0_i32 : i32, i32
  }
  func.func @transform_1(%arg0: i32, %arg1: i32, %arg2: memref<16xi32, #tpu.memory_space<smem>>) -> (i32, i32) {
    %c0_i32 = arith.constant 0 : i32
    %c0_i32_0 = arith.constant 0 : i32
    %c0_i32_1 = arith.constant 0 : i32
    return %c0_i32, %c0_i32_0 : i32, i32
  }
  func.func @transform_2(%arg0: i32, %arg1: i32, %arg2: memref<16xi32, #tpu.memory_space<smem>>) -> (i32, i32, i32) {
    %c0_i32 = arith.constant 0 : i32
    %c0_i32_0 = arith.constant 0 : i32
    return %arg0, %arg1, %c0_i32 : i32, i32, i32
  }
}

</mosaic_0001>

<llo_original>
// kernel: tpu_custom_call.1
$region0: #{tpu_custom_call.1}
  #allocation0 [shape = 'u32[]', space=smem, size = 0x4, offset = 0x4, fixed_abs, tag = 'smem constant byte address 0x4 - core index']
  #allocation1 [shape = 'u32[144,128]{1,0:T(1,128)}', space=vmem, size = 0x12000, scoped, tag = 'internal scratch']
  #allocation2 [shape = 's32[1]{0}', space=sflag, size = 0x4, scoped, tag = 'scoped memory for tpu_custom_call.1']
  #allocation3 [shape = 'u8[512]{0}', space=smem, size = 0x200, scoped, tag = 'prefetched SMEM operand 0']
  %s0 = inlined_call_operand.hbm [shape: s32[16], index: 0, kind: input, shape index: {}]
  %s1 = inlined_call_operand.hbm [shape: f32[8,128], index: 1, kind: input, shape index: {}]
  %s2 = inlined_call_operand.hbm [shape: f32[1000,128], index: 2, kind: input, shape index: {}]
  %s3 = inlined_call_operand.hbm [shape: f32[2,8,128], index: 3, kind: output, shape index: {}]
  %s4 = sld [smem:[#allocation0]]
  $region34: #{tpu_custom_call.1} parent=0
    _
  %s6 = ssub.s32 1, %s4
  %s7 = scalar_select 0, %s6, %s4
  %9 = dma.hbm_to_smem %s0, 16, [#allocation3], [#allocation2]
  %10 = dma.done [#allocation2], 16
  %11 = sfence
  $region1: #{tpu_custom_call.1} parent=0
    #allocation4 [shape = 'u8[4096]{0}', space=vmem, size = 0x1000, scoped, tag = 'input window, operand 1, single buffered']
    #allocation5 [shape = 's32[1]{0}', space=sflag, size = 0x4, scoped, tag = 'scoped memory for tpu_custom_call.1']
    #allocation6 [shape = 's32[1]{0}', space=sflag, size = 0x4, scoped, tag = 'scoped memory for tpu_custom_call.1']
    #allocation7 [shape = 'u8[512000]{0}', space=vmem, size = 0x7d000, scoped, tag = 'input window, operand 2, single buffered']
    #allocation8 [shape = 's32[1]{0}', space=sflag, size = 0x4, scoped, tag = 'scoped memory for tpu_custom_call.1']
    #allocation9 [shape = 'u8[8192]{0}', space=vmem, size = 0x2000, scoped, tag = 'output window, operand 0, single buffered']
    %12 = vsyncpa [#allocation5], 0
    %13 = vsyncpa [#allocation8], 0
    %14 = vsyncpa [#allocation6], 0
    // Predicated region
    $region2: #{tpu_custom_call.1} parent=1 // pred_check
      _
    $region3: #{tpu_custom_call.1} parent=1 // pred_check_branch
      %16 = sbr.rel (0) target = $region5
    $region4: #{tpu_custom_call.1} parent=1 // pred_region
      %s18 = ssub.s32 128, 128
      %19 = vsyncadd [#allocation5], %s18
      %s21 = sshll.u32 [#allocation4], 4
      %s22 = int_to_ptr.vmem [resolvable:$true] %s21
      %24 = dma.hbm_to_vmem [thread:$0]  %s1, 128, %s22, [#allocation5]
    $region5: #{tpu_custom_call.1} parent=1 // pred_fallthru
      _
    // Predicated region
    $region6: #{tpu_custom_call.1} parent=1 // pred_check
      _
    $region7: #{tpu_custom_call.1} parent=1 // pred_check_branch
      %26 = sbr.rel (0) target = $region9
    $region8: #{tpu_custom_call.1} parent=1 // pred_region
      %s28 = ssub.s32 16000, 16000
      %29 = vsyncadd [#allocation8], %s28
      %s30 = sshll.u32 [#allocation7], 4
      %s31 = int_to_ptr.vmem [resolvable:$true] %s30
      %36 = dma.hbm_to_vmem [thread:$0]  %s2, 16000, %s31, [#allocation8], 128, 128, 8
    $region9: #{tpu_custom_call.1} parent=1 // pred_fallthru
      _
    // Predicated region
    $region10: #{tpu_custom_call.1} parent=1 // pred_check
      _
    $region11: #{tpu_custom_call.1} parent=1 // pred_check_branch
      %38 = sbr.rel (0) target = $region13
    $region12: #{tpu_custom_call.1} parent=1 // pred_region
      %39 = dma.done [#allocation5], 128
    $region13: #{tpu_custom_call.1} parent=1 // pred_fallthru
      _
    // Predicated region
    $region14: #{tpu_custom_call.1} parent=1 // pred_check
      _
    $region15: #{tpu_custom_call.1} parent=1 // pred_check_branch
      %41 = sbr.rel (0) target = $region17
    $region16: #{tpu_custom_call.1} parent=1 // pred_region
      %42 = dma.done [#allocation8], 16000
    $region17: #{tpu_custom_call.1} parent=1 // pred_fallthru
      _
    %s43 = smul.u32 0, 2
    %s44 = smul.u32 0, 8
    %p45 = scmp.lt.s32.totalorder %s43, 2
    // Predicated region
    $region18: #{tpu_custom_call.1} parent=1 // pred_check
      %p46 = pneg %p45
    $region19: #{tpu_custom_call.1} parent=1 // pred_check_branch
      %48 = sbr.rel (%p46) target = $region21
    $region20: #{tpu_custom_call.1} parent=1 // pred_region
      %s49 = smul.u32 %s43, 8
      %s50 = sadd.s32 %s49, %s44
      %s51 = sld [smem:[#allocation3 + %s50]]
      %s52 = scalar_lea.vmem [#allocation7], %s51
      %v53 = vld [vmem:[%s52] sm:$0x1]
      %v54 = vld [vmem:[#allocation4] sm:$0x1]
      %v55 = vadd.f32 %v53, %v54
      %56 = vst [vmem:[#allocation9] sm:$0x1] %v55
      %s57 = sadd.s32 %s50, 1
      %s58 = sld [smem:[#allocation3 + %s57]]
      %s59 = scalar_lea.vmem [#allocation7], %s58
      %v60 = vld [vmem:[%s59] sm:$0x1]
      %v61 = vld [vmem:[#allocation4 + $0x1] sm:$0x1]
      %v62 = vadd.f32 %v60, %v61
      %63 = vst [vmem:[#allocation9 + $0x1] sm:$0x1] %v62
      %s64 = sadd.s32 %s50, 2
      %s65 = sld [smem:[#allocation3 + %s64]]
      %s66 = scalar_lea.vmem [#allocation7], %s65
      %v67 = vld [vmem:[%s66] sm:$0x1]
      %v68 = vld [vmem:[#allocation4 + $0x2] sm:$0x1]
      %v69 = vadd.f32 %v67, %v68
      %70 = vst [vmem:[#allocation9 + $0x2] sm:$0x1] %v69
      %s71 = sadd.s32 %s50, 3
      %s72 = sld [smem:[#allocation3 + %s71]]
      %s73 = scalar_lea.vmem [#allocation7], %s72
      %v74 = vld [vmem:[%s73] sm:$0x1]
      %v75 = vld [vmem:[#allocation4 + $0x3] sm:$0x1]
      %v76 = vadd.f32 %v74, %v75
      %77 = vst [vmem:[#allocation9 + $0x3] sm:$0x1] %v76
      %s78 = sadd.s32 %s50, 4
      %s79 = sld [smem:[#allocation3 + %s78]]
      %s80 = scalar_lea.vmem [#allocation7], %s79
      %v81 = vld [vmem:[%s80] sm:$0x1]
      %v82 = vld [vmem:[#allocation4 + $0x4] sm:$0x1]
      %v83 = vadd.f32 %v81, %v82
      %84 = vst [vmem:[#allocation9 + $0x4] sm:$0x1] %v83
      %s85 = sadd.s32 %s50, 5
      %s86 = sld [smem:[#allocation3 + %s85]]
      %s87 = scalar_lea.vmem [#allocation7], %s86
      %v88 = vld [vmem:[%s87] sm:$0x1]
      %v89 = vld [vmem:[#allocation4 + $0x5] sm:$0x1]
      %v90 = vadd.f32 %v88, %v89
      %91 = vst [vmem:[#allocation9 + $0x5] sm:$0x1] %v90
      %s92 = sadd.s32 %s50, 6
      %s93 = sld [smem:[#allocation3 + %s92]]
      %s94 = scalar_lea.vmem [#allocation7], %s93
      %v95 = vld [vmem:[%s94] sm:$0x1]
      %v96 = vld [vmem:[#allocation4 + $0x6] sm:$0x1]
      %v97 = vadd.f32 %v95, %v96
      %98 = vst [vmem:[#allocation9 + $0x6] sm:$0x1] %v97
      %s99 = sadd.s32 %s50, 7
      %s100 = sld [smem:[#allocation3 + %s99]]
      %s101 = scalar_lea.vmem [#allocation7], %s100
      %v102 = vld [vmem:[%s101] sm:$0x1]
      %v103 = vld [vmem:[#allocation4 + $0x7] sm:$0x1]
      %v104 = vadd.f32 %v102, %v103
      %105 = vst [vmem:[#allocation9 + $0x7] sm:$0x1] %v104
    $region21: #{tpu_custom_call.1} parent=1 // pred_fallthru
      _
    %s106 = sadd.s32 %s43, 1
    %p107 = scmp.lt.s32.totalorder %s106, 2
    // Predicated region
    $region22: #{tpu_custom_call.1} parent=1 // pred_check
      %p108 = pneg %p107
    $region23: #{tpu_custom_call.1} parent=1 // pred_check_branch
      %110 = sbr.rel (%p108) target = $region25
    $region24: #{tpu_custom_call.1} parent=1 // pred_region
      %s111 = smul.u32 %s106, 8
      %s112 = sadd.s32 %s111, %s44
      %s113 = sld [smem:[#allocation3 + %s112]]
      %s114 = scalar_lea.vmem [#allocation7], %s113
      %v115 = vld [vmem:[%s114] sm:$0x1]
      %v116 = vld [vmem:[#allocation4] sm:$0x1]
      %v117 = vadd.f32 %v115, %v116
      %s118 = scalar_lea.vmem [#allocation9], 8
      %119 = vst [vmem:[%s118] sm:$0x1] %v117
      %s120 = sadd.s32 %s112, 1
      %s121 = sld [smem:[#allocation3 + %s120]]
      %s122 = scalar_lea.vmem [#allocation7], %s121
      %v123 = vld [vmem:[%s122] sm:$0x1]
      %v124 = vld [vmem:[#allocation4 + $0x1] sm:$0x1]
      %v125 = vadd.f32 %v123, %v124
      %126 = vst [vmem:[%s118 + $0x1] sm:$0x1] %v125
      %s127 = sadd.s32 %s112, 2
      %s128 = sld [smem:[#allocation3 + %s127]]
      %s129 = scalar_lea.vmem [#allocation7], %s128
      %v130 = vld [vmem:[%s129] sm:$0x1]
      %v131 = vld [vmem:[#allocation4 + $0x2] sm:$0x1]
      %v132 = vadd.f32 %v130, %v131
      %133 = vst [vmem:[%s118 + $0x2] sm:$0x1] %v132
      %s134 = sadd.s32 %s112, 3
      %s135 = sld [smem:[#allocation3 + %s134]]
      %s136 = scalar_lea.vmem [#allocation7], %s135
      %v137 = vld [vmem:[%s136] sm:$0x1]
      %v138 = vld [vmem:[#allocation4 + $0x3] sm:$0x1]
      %v139 = vadd.f32 %v137, %v138
      %140 = vst [vmem:[%s118 + $0x3] sm:$0x1] %v139
      %s141 = sadd.s32 %s112, 4
      %s142 = sld [smem:[#allocation3 + %s141]]
      %s143 = scalar_lea.vmem [#allocation7], %s142
      %v144 = vld [vmem:[%s143] sm:$0x1]
      %v145 = vld [vmem:[#allocation4 + $0x4] sm:$0x1]
      %v146 = vadd.f32 %v144, %v145
      %147 = vst [vmem:[%s118 + $0x4] sm:$0x1] %v146
      %s148 = sadd.s32 %s112, 5
      %s149 = sld [smem:[#allocation3 + %s148]]
      %s150 = scalar_lea.vmem [#allocation7], %s149
      %v151 = vld [vmem:[%s150] sm:$0x1]
      %v152 = vld [vmem:[#allocation4 + $0x5] sm:$0x1]
      %v153 = vadd.f32 %v151, %v152
      %154 = vst [vmem:[%s118 + $0x5] sm:$0x1] %v153
      %s155 = sadd.s32 %s112, 6
      %s156 = sld [smem:[#allocation3 + %s155]]
      %s157 = scalar_lea.vmem [#allocation7], %s156
      %v158 = vld [vmem:[%s157] sm:$0x1]
      %v159 = vld [vmem:[#allocation4 + $0x6] sm:$0x1]
      %v160 = vadd.f32 %v158, %v159
      %161 = vst [vmem:[%s118 + $0x6] sm:$0x1] %v160
      %s162 = sadd.s32 %s112, 7
      %s163 = sld [smem:[#allocation3 + %s162]]
      %s164 = scalar_lea.vmem [#allocation7], %s163
      %v165 = vld [vmem:[%s164] sm:$0x1]
      %v166 = vld [vmem:[#allocation4 + $0x7] sm:$0x1]
      %v167 = vadd.f32 %v165, %v166
      %168 = vst [vmem:[%s118 + $0x7] sm:$0x1] %v167
    $region25: #{tpu_custom_call.1} parent=1 // pred_fallthru
      _
    // Predicated region
    $region26: #{tpu_custom_call.1} parent=1 // pred_check
      _
    $region27: #{tpu_custom_call.1} parent=1 // pred_check_branch
      %170 = sbr.rel (0) target = $region29
    $region28: #{tpu_custom_call.1} parent=1 // pred_region
      %s172 = ssub.s32 256, 256
      %173 = vsyncadd [#allocation6], %s172
      %s174 = sshll.u32 [#allocation9], 4
      %s175 = int_to_ptr.vmem [resolvable:$true] %s174
      %180 = dma.vmem_to_hbm [thread:$0]  %s175, 256, %s3, [#allocation6], 128, 128, 8
    $region29: #{tpu_custom_call.1} parent=1 // pred_fallthru
      _
    // Predicated region
    $region30: #{tpu_custom_call.1} parent=1 // pred_check
      _
    $region31: #{tpu_custom_call.1} parent=1 // pred_check_branch
      %182 = sbr.rel (0) target = $region33
    $region32: #{tpu_custom_call.1} parent=1 // pred_region
      %183 = dma.done [#allocation6], 256
    $region33: #{tpu_custom_call.1} parent=1 // pred_fallthru
      _
    %184 = vsyncpa [#allocation5], 1
    %185 = vsyncpa [#allocation8], 1
    %186 = vsyncpa [#allocation6], 1

</llo_original>
